<compile_context>
chip_gen: v5e
topology: v5e:2x2
jax: 0.10.0
libtpu: 0.0.40
codegen_flags: <defaults>
</compile_context>

<pallas_src>
import functools

import jax
import jax.numpy as jnp
from jax.experimental import pallas as pl
from jax.experimental.pallas import tpu as pltpu


def _round_up(x, m):
    return (x + m - 1) // m * m


# ----------------------------- Pallas kernel -------------------------------

def _linear_kernel(x_ref, w_ref, b_ref, o_ref, acc_ref):
    """One (tm, tk) x (tk, N) MXU step of y = x @ w + b with K-reduction grid."""
    k = pl.program_id(1)

    @pl.when(k == 0)
    def _():
        acc_ref[...] = jnp.zeros_like(acc_ref)

    acc_ref[...] += jnp.dot(x_ref[...], w_ref[...],
                            preferred_element_type=jnp.float32)

    @pl.when(k == pl.num_programs(1) - 1)
    def _():
        o_ref[...] = (acc_ref[...] + b_ref[...]).astype(o_ref.dtype)


def linear_pallas(x, w_t, b, *, tm, tk):
    """y = x @ w_t + b.

    x:   (M, K) f32 with M % tm == 0 and K % tk == 0 (padded by caller).
    w_t: (K, N) f32, pre-transposed; N is a multiple of 128 (lane-dense out).
    b:   (1, N) f32.
    """
    M, K = x.shape
    N = w_t.shape[1]
    grid = (M // tm, K // tk)
    return pl.pallas_call(
        _linear_kernel,
        out_shape=jax.ShapeDtypeStruct((M, N), jnp.float32),
        grid_spec=pltpu.PrefetchScalarGridSpec(
            num_scalar_prefetch=0,
            grid=grid,
            in_specs=[
                pl.BlockSpec((tm, tk), lambda i, k: (i, k)),   # activations
                pl.BlockSpec((tk, N), lambda i, k: (k, 0)),    # weight (K, N)
                pl.BlockSpec((1, N), lambda i, k: (0, 0)),     # bias
            ],
            out_specs=pl.BlockSpec((tm, N), lambda i, k: (i, 0)),
            scratch_shapes=[pltpu.VMEM((tm, N), jnp.float32)],
        ),
        compiler_params=pltpu.CompilerParams(
            # M axis shards across TensorCores on v7x; K is the reduction.
            dimension_semantics=("parallel", "arbitrary"),
        ),
    )(x, w_t, b)


# ------------------------------ model wrapper -------------------------------

def init_params(key, in_channels, num_actions):
    """PyTorch nn.Linear layout + init: weight (N, K), bias (N,)."""
    num_features = 1
    for dim in in_channels:
        num_features *= dim
    kw, kb = jax.random.split(key)
    bound = 1.0 / (num_features ** 0.5)
    weight = jax.random.uniform(kw, (num_actions, num_features),
                                jnp.float32, -bound, bound)
    bias = jax.random.uniform(kb, (num_actions,), jnp.float32, -bound, bound)
    return {"weight": weight, "bias": bias}


def prepare_device_params(params, *, tk, lane=128):
    """Done ONCE outside jit: transpose to (K, N) and zero-pad K to a tk
    multiple and N up to a 128-lane multiple. No per-call transpose copies."""
    w = params["weight"]                        # (N, K) PyTorch layout
    b = params["bias"]                          # (N,)
    N, K = w.shape
    Kp = _round_up(K, tk)
    Np = _round_up(N, lane)
    w_t = jnp.zeros((Kp, Np), jnp.float32).at[:K, :N].set(w.T)
    b_p = jnp.zeros((1, Np), jnp.float32).at[0, :N].set(b)
    return w_t, b_p


def linear_network_forward(x, w_t, b_p, num_actions, *, tm, tk):
    """x: (B, *feature_dims) -> Q-values (B, num_actions)."""
    B = x.shape[0]
    feat = x.reshape(B, -1)                     # PyTorch .view flatten order
    K = feat.shape[1]
    Kp = w_t.shape[0]
    Mp = _round_up(B, tm)
    # Zero-pad batch rows / feature cols; zeros contribute nothing to the dot.
    feat_p = jnp.zeros((Mp, Kp), jnp.float32).at[:B, :K].set(feat)
    y = linear_pallas(feat_p, w_t, b_p, tm=tm, tk=tk)
    return y[:B, :num_actions]


# --------------------------- pure-JAX reference -----------------------------

def linear_network_reference(params, x):
    feat = x.reshape(x.shape[0], -1)
    return feat @ params["weight"].T + params["bias"]


# ---------------------------------- main ------------------------------------

if __name__ == "__main__":
    key = jax.random.PRNGKey(0)
    in_channels = (4, 16, 16)                   # num_features = 4*16*16 = 1024
    num_actions = 6
    batch = 2

    x = jax.random.normal(jax.random.fold_in(key, 1),
                          (batch,) + in_channels, dtype=jnp.float32)
    params = init_params(key, in_channels, num_actions)

    num_features = 4 * 16 * 16
    # Tile sizes: tm sized to the (padded) batch, tk splits the K reduction so
    # the accumulator / pipeline pattern is exercised and VMEM stays bounded.
    tm = min(256, _round_up(batch, 8))
    tk = min(512, _round_up(num_features, 128))

    w_t, b_p = prepare_device_params(params, tk=tk)   # once, outside jit

    fwd = jax.jit(functools.partial(linear_network_forward,
                                    num_actions=num_actions, tm=tm, tk=tk))
    q = jax.block_until_ready(fwd(x, w_t, b_p))

    q_ref = jax.block_until_ready(linear_network_reference(params, x))
    assert q.shape == (batch, num_actions), q.shape
    assert jnp.allclose(q, q_ref, rtol=1e-2, atol=1e-2), (q, q_ref)

    print("KERNEL_OK")
</pallas_src>

<mosaic_0001>
module attributes {stable_mosaic.version = 11 : i64} {
  func.func @_linear_kernel(%arg0: i32, %arg1: i32, %arg2: memref<8x512xf32, #tpu.memory_space<vmem>>, %arg3: memref<512x128xf32, #tpu.memory_space<vmem>>, %arg4: memref<1x128xf32, #tpu.memory_space<vmem>>, %arg5: memref<8x128xf32, #tpu.memory_space<vmem>>, %arg6: memref<8x128xf32, #tpu.memory_space<vmem>>) attributes {dimension_semantics = [#tpu.dimension_semantics<parallel>, #tpu.dimension_semantics<arbitrary>], iteration_bounds = array<i64: 1, 2>, scalar_prefetch = 0 : i64, scratch_operands = 1 : i64, tpu.core_type = #tpu.core_type<tc>, window_params = [{transform_indices = @transform_0, window_bounds = array<i64: 8, 512>}, {transform_indices = @transform_1, window_bounds = array<i64: 512, 128>}, {pipeline_mode = #tpu.pipeline_mode<synchronous>, transform_indices = @transform_2, window_bounds = array<i64: 1, 128>}, {transform_indices = @transform_3, window_bounds = array<i64: 8, 128>}]} {
    %c0_i32 = arith.constant 0 : i32
    %0 = arith.cmpi eq, %arg1, %c0_i32 : i32
    %1 = arith.extui %0 : i1 to i32
    %c0_i32_0 = arith.constant 0 : i32
    %2 = arith.cmpi ne, %1, %c0_i32_0 : i32
    scf.if %2 {
      %cst_9 = arith.constant 0.000000e+00 : f32
      %12 = vector.broadcast %cst_9 : f32 to vector<8x128xf32>
      %c0_10 = arith.constant 0 : index
      %c0_11 = arith.constant 0 : index
      %13 = vector.load %arg6[%c0_10, %c0_11] : memref<8x128xf32, #tpu.memory_space<vmem>>, vector<8x128xf32>
      tpu.vector_store %arg6[%c0_10, %c0_11], %12 {strides = array<i32>} : memref<8x128xf32, #tpu.memory_space<vmem>>, vector<8x128xf32>,
    } else {
    }
    %c0 = arith.constant 0 : index
    %c0_1 = arith.constant 0 : index
    %3 = vector.load %arg6[%c0, %c0_1] : memref<8x128xf32, #tpu.memory_space<vmem>>, vector<8x128xf32>
    %c0_2 = arith.constant 0 : index
    %c0_3 = arith.constant 0 : index
    %4 = vector.load %arg2[%c0_2, %c0_3] : memref<8x512xf32, #tpu.memory_space<vmem>>, vector<8x512xf32>
    %c0_4 = arith.constant 0 : index
    %c0_5 = arith.constant 0 : index
    %5 = vector.load %arg3[%c0_4, %c0_5] : memref<512x128xf32, #tpu.memory_space<vmem>>, vector<512x128xf32>
    %cst = arith.constant dense<0.000000e+00> : vector<8x128xf32>
    %6 = tpu.matmul %4, %5, %cst {dimension_numbers = #tpu.dot_dimension_numbers<[1], [0], [0], [1], [0, 0, 1, 1], [], []>} : vector<8x512xf32>, vector<512x128xf32>, vector<8x128xf32> -> vector<8x128xf32>
    %7 = arith.addf %3, %6 : vector<8x128xf32>
    %c0_6 = arith.constant 0 : index
    %c0_7 = arith.constant 0 : index
    %8 = vector.load %arg6[%c0_6, %c0_7] : memref<8x128xf32, #tpu.memory_space<vmem>>, vector<8x128xf32>
    tpu.vector_store %arg6[%c0_6, %c0_7], %7 {strides = array<i32>} : memref<8x128xf32, #tpu.memory_space<vmem>>, vector<8x128xf32>,
    %c1_i32 = arith.constant 1 : i32
    %9 = arith.cmpi eq, %arg1, %c1_i32 : i32
    %10 = arith.extui %9 : i1 to i32
    %c0_i32_8 = arith.constant 0 : i32
    %11 = arith.cmpi ne, %10, %c0_i32_8 : i32
    scf.if %11 {
      %c0_9 = arith.constant 0 : index
      %c0_10 = arith.constant 0 : index
      %12 = vector.load %arg6[%c0_9, %c0_10] : memref<8x128xf32, #tpu.memory_space<vmem>>, vector<8x128xf32>
      %c0_11 = arith.constant 0 : index
      %c0_12 = arith.constant 0 : index
      %13 = vector.load %arg4[%c0_11, %c0_12] : memref<1x128xf32, #tpu.memory_space<vmem>>, vector<1x128xf32>
      %14 = vector.broadcast %13 : vector<1x128xf32> to vector<8x128xf32>
      %15 = arith.addf %12, %14 : vector<8x128xf32>
      %c0_13 = arith.constant 0 : index
      %c0_14 = arith.constant 0 : index
      %16 = vector.load %arg5[%c0_13, %c0_14] : memref<8x128xf32, #tpu.memory_space<vmem>>, vector<8x128xf32>
      tpu.vector_store %arg5[%c0_13, %c0_14], %15 {strides = array<i32>} : memref<8x128xf32, #tpu.memory_space<vmem>>, vector<8x128xf32>,
    } else {
    }
    return
  }
  func.func @transform_0(%arg0: i32, %arg1: i32) -> (i32, i32) {
    %c0_i32 = arith.constant 0 : i32
    return %arg0, %arg1 : i32, i32
  }
  func.func @transform_1(%arg0: i32, %arg1: i32) -> (i32, i32) {
    %c0_i32 = arith.constant 0 : i32
    %c0_i32_0 = arith.constant 0 : i32
    return %arg1, %c0_i32 : i32, i32
  }
  func.func @transform_2(%arg0: i32, %arg1: i32) -> (i32, i32) {
    %c0_i32 = arith.constant 0 : i32
    %c0_i32_0 = arith.constant 0 : i32
    %c0_i32_1 = arith.constant 0 : i32
    return %c0_i32, %c0_i32_0 : i32, i32
  }
  func.func @transform_3(%arg0: i32, %arg1: i32) -> (i32, i32) {
    %c0_i32 = arith.constant 0 : i32
    %c0_i32_0 = arith.constant 0 : i32
    return %arg0, %c0_i32 : i32, i32
  }
}

</mosaic_0001>

<llo_original>
// kernel: linear_network_forward.1
$region0: #{linear_network_forward.1}
  #allocation0 [shape = 'u32[]', space=smem, size = 0x4, offset = 0x4, fixed_abs, tag = 'smem constant byte address 0x4 - core index']
  #allocation1 [shape = 'u32[72,128]{1,0:T(1,128)}', space=vmem, size = 0x9000, scoped, tag = 'internal scratch']
  #allocation2 [shape = 'f32[8,128]{1,0:T(8,128)}', space=vmem, size = 0x1000, scoped, tag = 'scratch operand']
  %s0 = inlined_call_operand.vmem [shape: f32[8,1024], index: 0, kind: input, shape index: {}]
  %s1 = inlined_call_operand.hbm [shape: f32[1024,128], index: 1, kind: input, shape index: {}]
  %s2 = inlined_call_operand.vmem [shape: f32[1,128], index: 2, kind: input, shape index: {}]
  %s3 = inlined_call_operand.vmem [shape: f32[8,128], index: 3, kind: output, shape index: {}]
  %s4 = sld [smem:[#allocation0]]
  $region57: #{linear_network_forward.1} parent=0
    _
  %s6 = ssub.s32 1, %s4
  %s7 = scalar_select 0, %s6, %s4
  $region1: #{linear_network_forward.1} parent=0
    #allocation3 [shape = 'u8[524288]{0}', space=vmem, size = 0x80000, scoped, tag = 'input window, operand 1']
    #allocation4 [shape = 's32[2]{0}', space=sflag, size = 0x8, scoped, tag = 'scoped memory for linear_network_forward.1']
    %8 = vsyncpa [#allocation4], 0
    %s9 = scalar_lea.sflag [#allocation4], 1
    %10 = vsyncpa %s9, 0
    loop: start=0, step=1, limit=4
    $region2: #{linear_network_forward.1} parent=1 // loop_pre_header
      _
    $region3: #{linear_network_forward.1} parent=1 // loop_header
      %s12 = sphi 0, %s16
      %p13 = scmp.ge.s32.totalorder %s12, 4
      %s19 = sphi 0, %s31
      %s20 = sphi 0, %s27
      %s21 = sphi 0, %s19
      %s22 = sphi 0, %s20
      %s23 = sphi 0, %s21
      %s24 = sphi 0, %s22
      %s36 = sphi 0, %s38
      %s39 = sphi 0, %s36
      %s40 = sphi 0, %s39
      %s56 = sphi 0, %s40
      %s62 = sphi 0, %s64
      %s65 = sphi 0, %s62
      %s66 = sphi 0, %s65
      %s82 = sphi 0, %s66
      %s86 = sphi 0, %s86
      %s88 = sphi 0, %s86
      %s89 = sphi 0, %s88
      %s103 = sphi 0, %s89
      %s109 = sphi 0, %s111
      %s112 = sphi 0, %s109
      %s113 = sphi 0, %s112
      %s129 = sphi 0, %s113
    $region4: #{linear_network_forward.1} parent=1 // loop_header_branch
      %15 = sbr.rel (%p13) target = $region8
    $region5: #{linear_network_forward.1} parent=1 // loop_body
      %s17 = ssub.s32 %s12, 1
      %s18 = ssub.s32 %s12, 2
      %s25 = sadd.s32 1, %s20
      %p26 = scmp.ge.s32.totalorder %s25, 2
      %s27 = scalar_select %p26, 0, %s25
      %s28 = sadd.s32 1, %s19
      %s29 = scalar_select %p26, %s28, %s19
      %p30 = scmp.ge.s32.totalorder %s29, 1
      %s31 = scalar_select %p30, 0, %s29
      %s32 = ssub.s32 %s19, %s31
      %s33 = ssub.s32 %s20, %s27
      %s34 = sor.u32 %s32, %s33
      %p35 = scmp.eq.s32.totalorder %s34, 0
      %s37 = sadd.s32 %s36, 1
      %s38 = scalar_select %p35, %s36, %s37
      %p41 = pneg %p35
      %p42 = scmp.eq.s32.totalorder %s12, 1
      %p43 = por %p41, %p42
      %p44 = scmp.ne.s32.totalorder %s36, %s39
      %p45 = scmp.eq.s32.totalorder %s12, 0
      %p46 = por %p44, %p45
      %p47 = scmp.ne.s32.totalorder %s36, %s39
      %p48 = scmp.eq.s32.totalorder %s17, 1
      %p49 = por %p47, %p48
      %p50 = scmp.ne.s32.totalorder %s39, %s40
      %p51 = scmp.eq.s32.totalorder %s17, 0
      %p52 = por %p50, %p51
      %p53 = scmp.ne.s32.totalorder %s39, %s40
      %p54 = scmp.eq.s32.totalorder %s18, 1
      %p55 = por %p53, %p54
      %p57 = scmp.ne.s32.totalorder %s40, %s56
      %p58 = scmp.eq.s32.totalorder %s18, 0
      %p59 = por %p57, %p58
      %s60 = ssub.s32 %s20, %s27
      %p61 = scmp.eq.s32.totalorder %s60, 0
      %s63 = sadd.s32 %s62, 1
      %s64 = scalar_select %p61, %s62, %s63
      %p67 = pneg %p61
      %p68 = scmp.eq.s32.totalorder %s12, 1
      %p69 = por %p67, %p68
      %p70 = scmp.ne.s32.totalorder %s62, %s65
      %p71 = scmp.eq.s32.totalorder %s12, 0
      %p72 = por %p70, %p71
      %p73 = scmp.ne.s32.totalorder %s62, %s65
      %p74 = scmp.eq.s32.totalorder %s17, 1
      %p75 = por %p73, %p74
      %p76 = scmp.ne.s32.totalorder %s65, %s66
      %p77 = scmp.eq.s32.totalorder %s17, 0
      %p78 = por %p76, %p77
      %p79 = scmp.ne.s32.totalorder %s65, %s66
      %p80 = scmp.eq.s32.totalorder %s18, 1
      %p81 = por %p79, %p80
      %p83 = scmp.ne.s32.totalorder %s66, %s82
      %p84 = scmp.eq.s32.totalorder %s18, 0
      %p85 = por %p83, %p84
      %s87 = sadd.s32 %s86, 1
      %p90 = scmp.eq.s32.totalorder %s12, 1
      %p91 = scmp.ne.s32.totalorder %s86, %s88
      %p92 = scmp.eq.s32.totalorder %s12, 0
      %p93 = por %p91, %p92
      %p94 = scmp.ne.s32.totalorder %s86, %s88
      %p95 = scmp.eq.s32.totalorder %s17, 1
      %p96 = por %p94, %p95
      %p97 = scmp.ne.s32.totalorder %s88, %s89
      %p98 = scmp.eq.s32.totalorder %s17, 0
      %p99 = por %p97, %p98
      %p100 = scmp.ne.s32.totalorder %s88, %s89
      %p101 = scmp.eq.s32.totalorder %s18, 1
      %p102 = por %p100, %p101
      %p104 = scmp.ne.s32.totalorder %s89, %s103
      %p105 = scmp.eq.s32.totalorder %s18, 0
      %p106 = por %p104, %p105
      %s107 = ssub.s32 %s19, %s31
      %p108 = scmp.eq.s32.totalorder %s107, 0
      %s110 = sadd.s32 %s109, 1
      %s111 = scalar_select %p108, %s109, %s110
      %p114 = pneg %p108
      %p115 = scmp.eq.s32.totalorder %s12, 1
      %p116 = por %p114, %p115
      %p117 = scmp.ne.s32.totalorder %s109, %s112
      %p118 = scmp.eq.s32.totalorder %s12, 0
      %p119 = por %p117, %p118
      %p120 = scmp.ne.s32.totalorder %s109, %s112
      %p121 = scmp.eq.s32.totalorder %s17, 1
      %p122 = por %p120, %p121
      %p123 = scmp.ne.s32.totalorder %s112, %s113
      %p124 = scmp.eq.s32.totalorder %s17, 0
      %p125 = por %p123, %p124
      %p126 = scmp.ne.s32.totalorder %s112, %s113
      %p127 = scmp.eq.s32.totalorder %s18, 1
      %p128 = por %p126, %p127
      %p130 = scmp.ne.s32.totalorder %s113, %s129
      %p131 = scmp.eq.s32.totalorder %s18, 0
      %p132 = por %p130, %p131
      %p133 = scmp.le.s32.totalorder 1, %s12
      %p134 = scmp.lt.s32.totalorder %s12, 3
      %p135 = pnand %p133, %p134
      %p136 = pneg %p135
      // Predicated region
      $region9: #{linear_network_forward.1} parent=5 // pred_check
        _
      $region10: #{linear_network_forward.1} parent=5 // pred_check_branch
        %138 = sbr.rel (%p135) target = $region12
      $region11: #{linear_network_forward.1} parent=5 // pred_region
        %s139 = ssub.s32 %s12, 1
        // Predicated region
        $region13: #{linear_network_forward.1} parent=11 // pred_check
          %p140 = pneg %p99
        $region14: #{linear_network_forward.1} parent=11 // pred_check_branch
          %142 = sbr.rel (%p140) target = $region16
        $region15: #{linear_network_forward.1} parent=11 // pred_region
          _
        $region16: #{linear_network_forward.1} parent=11 // pred_fallthru
          _
      $region12: #{linear_network_forward.1} parent=5 // pred_fallthru
        _
      %p143 = scmp.lt.s32.totalorder %s12, 2
      // Predicated region
      $region17: #{linear_network_forward.1} parent=5 // pred_check
        %p144 = pneg %p143
      $region18: #{linear_network_forward.1} parent=5 // pred_check_branch
        %146 = sbr.rel (%p144) target = $region20
      $region19: #{linear_network_forward.1} parent=5 // pred_region
        // Predicated region
        $region21: #{linear_network_forward.1} parent=19 // pred_check
          %p147 = pneg %p46
        $region22: #{linear_network_forward.1} parent=19 // pred_check_branch
          %149 = sbr.rel (%p147) target = $region24
        $region23: #{linear_network_forward.1} parent=19 // pred_region
          %s150 = smul.u32 4, %s20
          %p151 = scmp.lt.s32.totalorder %s19, 0
          %s152 = scalar_select %p151, %s19, 0
          %p153 = scmp.lt.s32.totalorder %s150, 7
          %s154 = scalar_select %p153, %s150, 7
          %s155 = smul.addr %s152, 8
          %s156 = sadd.s32 %s154, %s155
          %s157 = smul.addr %s156, 8
          %s158 = scalar_lea.vmem %s0, %s157
          %s159 = smul.u32 4, %s20
        $region24: #{linear_network_forward.1} parent=19 // pred_fallthru
          _
        // Predicated region
        $region25: #{linear_network_forward.1} parent=19 // pred_check
          %p160 = pneg %p72
        $region26: #{linear_network_forward.1} parent=19 // pred_check_branch
          %162 = sbr.rel (%p160) target = $region28
        $region27: #{linear_network_forward.1} parent=19 // pred_region
          %s163 = sand.u32 %s62, 1
          %s164 = scalar_lea.sflag [#allocation4], %s163
          %s165 = sand.u32 %s62, 1
          %s166 = smul.addr %s165, 512
          %s167 = scalar_lea.vmem [#allocation3], %s166
          %s168 = smul.u32 64, %s20
          %170 = vsyncadd %s164, 0
          %s171 = smul.addr %s168, 8
          %s172 = scalar_lea.hbm %s1, %s171
          %s173 = sshll.u32 %s172, 4
          %s174 = int_to_ptr.hbm [resolvable:$true] %s173
          %s175 = sshll.u32 %s167, 4
          %s176 = int_to_ptr.vmem [resolvable:$true] %s175
          %181 = dma.hbm_to_vmem [thread:$0]  %s174, 8192, %s176, %s164, 128, 128, 8
        $region28: #{linear_network_forward.1} parent=19 // pred_fallthru
          _
      $region20: #{linear_network_forward.1} parent=5 // pred_fallthru
        _
      %p182 = scmp.le.s32.totalorder 1, %s12
      %p183 = scmp.lt.s32.totalorder %s12, 3
      %p184 = pnand %p182, %p183
      %p185 = pneg %p184
      // Predicated region
      $region29: #{linear_network_forward.1} parent=5 // pred_check
        _
      $region30: #{linear_network_forward.1} parent=5 // pred_check_branch
        %187 = sbr.rel (%p184) target = $region32
      $region31: #{linear_network_forward.1} parent=5 // pred_region
        %s188 = ssub.s32 %s12, 1
        %s189 = sand.u32 %s65, 1
        %s190 = scalar_lea.sflag [#allocation4], %s189
        %s191 = sand.u32 %s65, 1
        %s192 = smul.addr %s191, 512
        %s193 = scalar_lea.vmem [#allocation3], %s192
        // Predicated region
        $region33: #{linear_network_forward.1} parent=31 // pred_check
          %p194 = pneg %p78
        $region34: #{linear_network_forward.1} parent=31 // pred_check_branch
          %196 = sbr.rel (%p194) target = $region36
        $region35: #{linear_network_forward.1} parent=31 // pred_region
          %198 = dma.done %s190, 8192
        $region36: #{linear_network_forward.1} parent=31 // pred_fallthru
          _
        %s199 = smul.u32 4, %s22
        %p200 = scmp.lt.s32.totalorder %s21, 0
        %s201 = scalar_select %p200, %s21, 0
        %p202 = scmp.lt.s32.totalorder %s199, 7
        %s203 = scalar_select %p202, %s199, 7
        %s204 = smul.addr %s201, 8
        %s205 = sadd.s32 %s203, %s204
        %s206 = smul.addr %s205, 8
        %s207 = scalar_lea.vmem %s0, %s206
        %p208 = pneg %p52
        %p209 = pneg %p49
        %s210 = sand.u32 %s65, 1
        %s211 = scalar_lea.sflag [#allocation4], %s210
        %s212 = sand.u32 %s65, 1
        %s213 = smul.addr %s212, 512
        %s214 = scalar_lea.vmem [#allocation3], %s213
        %p215 = pneg %p78
        %p216 = pneg %p75
        %p217 = pneg %p99
        %p218 = pneg %p96
        %p219 = pneg %p125
        %p220 = pneg %p122
        %p221 = scmp.lt.s32.totalorder %s21, 0
        %s222 = scalar_select %p221, %s21, 0
        %s223 = smul.addr %s222, 8
        %s224 = scalar_lea.vmem %s3, %s223
        %s225 = smul.u32 4, %s22
        %p226 = scmp.lt.s32.totalorder %s21, 0
        %s227 = scalar_select %p226, %s21, 0
        %p228 = scmp.lt.s32.totalorder %s225, 7
        %s229 = scalar_select %p228, %s225, 7
        %s230 = smul.addr %s227, 8
        %s231 = sadd.s32 %s229, %s230
        %s232 = smul.addr %s231, 8
        %s233 = scalar_lea.vmem %s0, %s232
        %s234 = smul.u32 4, %s22
        %s235 = smul.u32 64, %s22
        %p236 = scmp.lt.s32.totalorder %s21, 0
        %s237 = scalar_select %p236, %s21, 0
        %s238 = smul.addr %s237, 8
        %s239 = scalar_lea.vmem %s3, %s238
        %p240 = scmp.eq.s32.totalorder %s22, 0
        // Predicated region
        $region37: #{linear_network_forward.1} parent=31 // pred_check
          %p241 = pneg %p240
        $region38: #{linear_network_forward.1} parent=31 // pred_check_branch
          %243 = sbr.rel (%p241) target = $region40
        $region39: #{linear_network_forward.1} parent=31 // pred_region
          %244 = vst [vmem:[#allocation2] sm:$0xff] 0.0
        $region40: #{linear_network_forward.1} parent=31 // pred_fallthru
          _
        %v245 = vld [vmem:[#allocation2] sm:$0xff]
        %v246 = vld [vmem:[%s233] sm:$0xff]
        %v247 = vld [vmem:[%s233 + $0x8] sm:$0xff]
        %v248 = vld [vmem:[%s233 + $0x10] sm:$0xff]
        %v249 = vld [vmem:[%s233 + $0x18] sm:$0xff]
        %v250 = vld [vmem:[%s193] sm:$0xff]
        %v251 = vld [vmem:[%s193 + $0x8] sm:$0xff]
        %v252 = vld [vmem:[%s193 + $0x10] sm:$0xff]
        %v253 = vld [vmem:[%s193 + $0x18] sm:$0xff]
        %v254 = vld [vmem:[%s193 + $0x20] sm:$0xff]
        %v255 = vld [vmem:[%s193 + $0x28] sm:$0xff]
        %v256 = vld [vmem:[%s193 + $0x30] sm:$0xff]
        %v257 = vld [vmem:[%s193 + $0x38] sm:$0xff]
        %v258 = vld [vmem:[%s193 + $0x40] sm:$0xff]
        %v259 = vld [vmem:[%s193 + $0x48] sm:$0xff]
        %v260 = vld [vmem:[%s193 + $0x50] sm:$0xff]
        %v261 = vld [vmem:[%s193 + $0x58] sm:$0xff]
        %v262 = vld [vmem:[%s193 + $0x60] sm:$0xff]
        %v263 = vld [vmem:[%s193 + $0x68] sm:$0xff]
        %v264 = vld [vmem:[%s193 + $0x70] sm:$0xff]
        %v265 = vld [vmem:[%s193 + $0x78] sm:$0xff]
        %v266 = vld [vmem:[%s193 + $0x80] sm:$0xff]
        %v267 = vld [vmem:[%s193 + $0x88] sm:$0xff]
        %v268 = vld [vmem:[%s193 + $0x90] sm:$0xff]
        %v269 = vld [vmem:[%s193 + $0x98] sm:$0xff]
        %v270 = vld [vmem:[%s193 + $0xa0] sm:$0xff]
        %v271 = vld [vmem:[%s193 + $0xa8] sm:$0xff]
        %v272 = vld [vmem:[%s193 + $0xb0] sm:$0xff]
        %v273 = vld [vmem:[%s193 + $0xb8] sm:$0xff]
        %v274 = vld [vmem:[%s193 + $0xc0] sm:$0xff]
        %v275 = vld [vmem:[%s193 + $0xc8] sm:$0xff]
        %v276 = vld [vmem:[%s193 + $0xd0] sm:$0xff]
        %v277 = vld [vmem:[%s193 + $0xd8] sm:$0xff]
        %v278 = vld [vmem:[%s193 + $0xe0] sm:$0xff]
        %v279 = vld [vmem:[%s193 + $0xe8] sm:$0xff]
        %v280 = vld [vmem:[%s193 + $0xf0] sm:$0xff]
        %v281 = vld [vmem:[%s193 + $0xf8] sm:$0xff]
        %v282 = vld [vmem:[%s193 + $0x100] sm:$0xff]
        %v283 = vld [vmem:[%s193 + $0x108] sm:$0xff]
        %v284 = vld [vmem:[%s193 + $0x110] sm:$0xff]
        %v285 = vld [vmem:[%s193 + $0x118] sm:$0xff]
        %v286 = vld [vmem:[%s193 + $0x120] sm:$0xff]
        %v287 = vld [vmem:[%s193 + $0x128] sm:$0xff]
        %v288 = vld [vmem:[%s193 + $0x130] sm:$0xff]
        %v289 = vld [vmem:[%s193 + $0x138] sm:$0xff]
        %v290 = vld [vmem:[%s193 + $0x140] sm:$0xff]
        %v291 = vld [vmem:[%s193 + $0x148] sm:$0xff]
        %v292 = vld [vmem:[%s193 + $0x150] sm:$0xff]
        %v293 = vld [vmem:[%s193 + $0x158] sm:$0xff]
        %v294 = vld [vmem:[%s193 + $0x160] sm:$0xff]
        %v295 = vld [vmem:[%s193 + $0x168] sm:$0xff]
        %v296 = vld [vmem:[%s193 + $0x170] sm:$0xff]
        %v297 = vld [vmem:[%s193 + $0x178] sm:$0xff]
        %v298 = vld [vmem:[%s193 + $0x180] sm:$0xff]
        %v299 = vld [vmem:[%s193 + $0x188] sm:$0xff]
        %v300 = vld [vmem:[%s193 + $0x190] sm:$0xff]
        %v301 = vld [vmem:[%s193 + $0x198] sm:$0xff]
        %v302 = vld [vmem:[%s193 + $0x1a0] sm:$0xff]
        %v303 = vld [vmem:[%s193 + $0x1a8] sm:$0xff]
        %v304 = vld [vmem:[%s193 + $0x1b0] sm:$0xff]
        %v305 = vld [vmem:[%s193 + $0x1b8] sm:$0xff]
        %v306 = vld [vmem:[%s193 + $0x1c0] sm:$0xff]
        %v307 = vld [vmem:[%s193 + $0x1c8] sm:$0xff]
        %v308 = vld [vmem:[%s193 + $0x1d0] sm:$0xff]
        %v309 = vld [vmem:[%s193 + $0x1d8] sm:$0xff]
        %v310 = vld [vmem:[%s193 + $0x1e0] sm:$0xff]
        %v311 = vld [vmem:[%s193 + $0x1e8] sm:$0xff]
        %v312 = vld [vmem:[%s193 + $0x1f0] sm:$0xff]
        %v313 = vld [vmem:[%s193 + $0x1f8] sm:$0xff]
        %314 = vmatpush.msra.mxu0 %v265
        %315 = vmatpush.msra.mxu0 %v264
        %316 = vmatpush.msra.mxu0 %v263
        %317 = vmatpush.msra.mxu0 %v262
        %318 = vmatpush.msra.mxu0 %v261
        %319 = vmatpush.msra.mxu0 %v260
        %320 = vmatpush.msra.mxu0 %v259
        %321 = vmatpush.msra.mxu0 %v258
        %322 = vmatpush.msra.mxu0 %v257
        %323 = vmatpush.msra.mxu0 %v256
        %324 = vmatpush.msra.mxu0 %v255
        %325 = vmatpush.msra.mxu0 %v254
        %326 = vmatpush.msra.mxu0 %v253
        %327 = vmatpush.msra.mxu0 %v252
        %328 = vmatpush.msra.mxu0 %v251
        %329 = vmatpush.msra.mxu0 %v250
        %330 = vmatmul.f32.gmra.mxu0 %v246
        %v331 = vpop.f32.mrf.mxu0
        %v332 = vadd.f32 0.0, %v331
        %333 = vdwg.mxu0
        %334 = vmatpush.msra.mxu0 %v281
        %335 = vmatpush.msra.mxu0 %v280
        %336 = vmatpush.msra.mxu0 %v279
        %337 = vmatpush.msra.mxu0 %v278
        %338 = vmatpush.msra.mxu0 %v277
        %339 = vmatpush.msra.mxu0 %v276
        %340 = vmatpush.msra.mxu0 %v275
        %341 = vmatpush.msra.mxu0 %v274
        %342 = vmatpush.msra.mxu0 %v273
        %343 = vmatpush.msra.mxu0 %v272
        %344 = vmatpush.msra.mxu0 %v271
        %345 = vmatpush.msra.mxu0 %v270
        %346 = vmatpush.msra.mxu0 %v269
        %347 = vmatpush.msra.mxu0 %v268
        %348 = vmatpush.msra.mxu0 %v267
        %349 = vmatpush.msra.mxu0 %v266
        %350 = vmatmul.f32.gmra.mxu0 %v247
        %v351 = vpop.f32.mrf.mxu0
        %v352 = vadd.f32 %v332, %v351
        %353 = vdwg.mxu0
        %354 = vmatpush.msra.mxu0 %v297
        %355 = vmatpush.msra.mxu0 %v296
        %356 = vmatpush.msra.mxu0 %v295
        %357 = vmatpush.msra.mxu0 %v294
        %358 = vmatpush.msra.mxu0 %v293
        %359 = vmatpush.msra.mxu0 %v292
        %360 = vmatpush.msra.mxu0 %v291
        %361 = vmatpush.msra.mxu0 %v290
        %362 = vmatpush.msra.mxu0 %v289
        %363 = vmatpush.msra.mxu0 %v288
        %364 = vmatpush.msra.mxu0 %v287
        %365 = vmatpush.msra.mxu0 %v286
        %366 = vmatpush.msra.mxu0 %v285
        %367 = vmatpush.msra.mxu0 %v284
        %368 = vmatpush.msra.mxu0 %v283
        %369 = vmatpush.msra.mxu0 %v282
        %370 = vmatmul.f32.gmra.mxu0 %v248
        %v371 = vpop.f32.mrf.mxu0
        %v372 = vadd.f32 %v352, %v371
        %373 = vdwg.mxu0
        %374 = vmatpush.msra.mxu0 %v313
        %375 = vmatpush.msra.mxu0 %v312
        %376 = vmatpush.msra.mxu0 %v311
        %377 = vmatpush.msra.mxu0 %v310
        %378 = vmatpush.msra.mxu0 %v309
        %379 = vmatpush.msra.mxu0 %v308
        %380 = vmatpush.msra.mxu0 %v307
        %381 = vmatpush.msra.mxu0 %v306
        %382 = vmatpush.msra.mxu0 %v305
        %383 = vmatpush.msra.mxu0 %v304
        %384 = vmatpush.msra.mxu0 %v303
        %385 = vmatpush.msra.mxu0 %v302
        %386 = vmatpush.msra.mxu0 %v301
        %387 = vmatpush.msra.mxu0 %v300
        %388 = vmatpush.msra.mxu0 %v299
        %389 = vmatpush.msra.mxu0 %v298
        %390 = vmatmul.f32.gmra.mxu0 %v249
        %v391 = vpop.f32.mrf.mxu0
        %v392 = vadd.f32 %v372, %v391
        %393 = vdwg.mxu0
        %v394 = vadd.f32 %v245, %v392
        %395 = vst [vmem:[#allocation2] sm:$0xff] %v394
        %p396 = scmp.eq.s32.totalorder %s22, 1
        // Predicated region
        $region41: #{linear_network_forward.1} parent=31 // pred_check
          %p397 = pneg %p396
        $region42: #{linear_network_forward.1} parent=31 // pred_check_branch
          %399 = sbr.rel (%p397) target = $region44
        $region43: #{linear_network_forward.1} parent=31 // pred_region
          %v400 = vld [vmem:[#allocation2] sm:$0xff]
          %v401 = vld [vmem:[%s2] sm:$0x1]
          %v403 = vperm.slane %v401, 0
          %v405 = vadd.f32 %v400, %v403
          %406 = vst [vmem:[%s239] sm:$0xff] %v405
        $region44: #{linear_network_forward.1} parent=31 // pred_fallthru
          _
        %p407 = scmp.lt.s32.totalorder %s21, 0
        %s408 = scalar_select %p407, %s21, 0
        %s409 = smul.addr %s408, 8
        %s410 = scalar_lea.vmem %s3, %s409
        // Predicated region
        $region45: #{linear_network_forward.1} parent=31 // pred_check
          %p411 = pneg %p122
        $region46: #{linear_network_forward.1} parent=31 // pred_check_branch
          %413 = sbr.rel (%p411) target = $region48
        $region47: #{linear_network_forward.1} parent=31 // pred_region
          _
        $region48: #{linear_network_forward.1} parent=31 // pred_fallthru
          _
        // Predicated region
        $region49: #{linear_network_forward.1} parent=31 // pred_check
          %p414 = pneg %p122
        $region50: #{linear_network_forward.1} parent=31 // pred_check_branch
          %416 = sbr.rel (%p414) target = $region52
        $region51: #{linear_network_forward.1} parent=31 // pred_region
          %p417 = scmp.lt.s32.totalorder %s21, 0
          %s418 = scalar_select %p417, %s21, 0
          %s419 = smul.addr %s418, 8
          %s420 = scalar_lea.vmem %s3, %s419
        $region52: #{linear_network_forward.1} parent=31 // pred_fallthru
          _
      $region32: #{linear_network_forward.1} parent=5 // pred_fallthru
        _
      %p421 = scmp.le.s32.totalorder 2, %s12
      // Predicated region
      $region53: #{linear_network_forward.1} parent=5 // pred_check
        %p422 = pneg %p421
      $region54: #{linear_network_forward.1} parent=5 // pred_check_branch
        %424 = sbr.rel (%p422) target = $region56
      $region55: #{linear_network_forward.1} parent=5 // pred_region
        %s425 = ssub.s32 %s12, 2
      $region56: #{linear_network_forward.1} parent=5 // pred_fallthru
        _
    $region6: #{linear_network_forward.1} parent=1 // loop_footer
      %s16 = sadd.s32 1, %s12
    $region7: #{linear_network_forward.1} parent=1 // loop_footer_branch
      %11 = sbr.rel target = $region3
    $region8: #{linear_network_forward.1} parent=1 // loop_exit
      _
    %426 = vsyncpa [#allocation4], 1
    %s427 = scalar_lea.sflag [#allocation4], 1
    %428 = vsyncpa %s427, 1

</llo_original>
